<compile_context>
chip_gen: v7x
topology: tpu7x:2x2x1
jax: 0.10.0
libtpu: 0.0.40
codegen_flags: <defaults>
</compile_context>

<pallas_src>
import jax
import jax.numpy as jnp
from jax.experimental import pallas as pl
from jax.experimental.pallas import tpu as pltpu


def _ppd_kernel(logits_ref, tgt_ref, sum_ref, loss_acc):
    """Accumulates per-row squared errors of gathered logits.

    logits_ref: (TN, C) tile in native dtype (bf16 stays bf16)
    tgt_ref:    (TN, 1) int32 tile (-1 means ignore)
    sum_ref:    (8, 128) f32 output slot for this core-split (written once)
    loss_acc:   (TN, 1) f32 VMEM scratch, resident across the inner grid axis
    """
    i = pl.program_id(1)

    @pl.when(i == 0)
    def _():
        loss_acc[...] = jnp.zeros_like(loss_acc)

    x = logits_ref[...]                                   # (TN, C) native dtype
    t = tgt_ref[...]                                      # (TN, 1) int32

    # One-hot "gather" of logits[row, target[row]]: lane-iota compare + select,
    # then an MXU reduce against a ones column (vmatmul instead of an XLU
    # cross-lane reduce).  Rows whose target is outside [0, C) select no lane
    # and therefore produce picked == 0.
    col = jax.lax.broadcasted_iota(jnp.int32, x.shape, 1)
    onehot = col == t                                     # (TN, C) bool
    masked = jnp.where(onehot, x, jnp.zeros_like(x))      # native dtype, bit-exact
    ones_col = jnp.ones((x.shape[1], 1), dtype=x.dtype)
    picked = jnp.dot(masked, ones_col,
                     preferred_element_type=jnp.float32)  # (TN, 1) f32

    diff = 1.0 - picked
    # Ignored rows (t == -1, incl. padding rows) must contribute 0: picked == 0
    # would otherwise give (1 - 0)^2 == 1.
    loss_acc[...] += jnp.where(t != -1, diff * diff, 0.0)

    @pl.when(i == pl.num_programs(1) - 1)
    def _():
        total = jnp.sum(loss_acc[...])
        # Lane/sublane-aligned scalar slot: write the whole (8, 128) block so the
        # store is unmasked and the block is fully defined.
        sum_ref[...] = jnp.full(sum_ref.shape, total, dtype=jnp.float32)


def _vmem_budget_bytes():
    """Per-chip (budget for tile sizing, scoped-VMEM limit) in bytes."""
    try:
        cap = int(pltpu.get_tpu_info().vmem_capacity_bytes)
    except Exception:            # unknown target / interpret: assume v7x-sized VMEM
        cap = 64 << 20
    if cap <= (64 << 20):        # v7x class: 64 MiB physical per TensorCore
        return 24 << 20, 32 << 20
    return 40 << 20, 64 << 20    # v5e / v6e: 128 MiB physical


def _pick_row_tile(n, c_pad, itemsize, budget_bytes, *, max_tile=8192):
    """Largest sublane-safe row tile whose per-step VMEM footprint fits the budget."""
    # Per-row VMEM bytes:
    #   2x logits block (double-buffered)          : 2 * c_pad * itemsize
    #   masked MXU operand + streamed temps slack  : c_pad * itemsize + 4 * c_pad
    #   2x target block (lane-padded to 128) + acc : 3 * 128 * 4
    per_row = 3 * c_pad * itemsize + 4 * c_pad + 3 * 128 * 4
    tile = max(32, min(max_tile, budget_bytes // per_row))
    tile = (int(tile) // 32) * 32             # multiple of 32: safe sublanes for f32/bf16/int8
    n_rounded = ((int(n) + 31) // 32) * 32
    return max(32, min(tile, n_rounded))


def ppd_loss(contrast_logits, contrast_target, *, row_tile=None):
    """Pallas implementation of PPD.forward (mean (1 - gathered_logit)^2, ignore=-1)."""
    N, C = contrast_logits.shape
    itemsize = int(jnp.dtype(contrast_logits.dtype).itemsize)
    c_pad = ((C + 127) // 128) * 128

    budget_bytes, vmem_limit = _vmem_budget_bytes()
    if row_tile is None:
        row_tile = _pick_row_tile(N, c_pad, itemsize, budget_bytes)
    row_tile = int(row_tile)

    targets = contrast_target.astype(jnp.int32)
    # Denominator computed with a plain-JAX reduce over the raw targets (4N bytes,
    # <2% of logits traffic) instead of an in-kernel count column.
    denom = jnp.sum(contrast_target != -1).astype(jnp.float32)

    n_tiles = int(pl.cdiv(N, row_tile))
    # Leading 2-way split: on v7x each TensorCore takes half the tiles; on
    # single-core chips it is just a reshaped (and equally long) loop.
    split = 2 if n_tiles >= 2 else 1
    n_tiles_pad = int(pl.cdiv(n_tiles, split)) * split
    n_inner = n_tiles_pad // split
    n_pad = n_tiles_pad * row_tile

    logits = contrast_logits
    if n_pad != N:
        logits = jnp.pad(logits, ((0, n_pad - N), (0, 0)))
        targets = jnp.pad(targets, ((0, n_pad - N),), constant_values=-1)
    targets = targets.reshape(n_pad, 1)

    cost = pl.CostEstimate(
        flops=int(5 * n_pad * C),
        transcendentals=0,
        bytes_accessed=int(n_pad * (C * itemsize + 4) + split * 8 * 128 * 4),
    )

    partial = pl.pallas_call(
        _ppd_kernel,
        out_shape=jax.ShapeDtypeStruct((split * 8, 128), jnp.float32),
        grid_spec=pltpu.PrefetchScalarGridSpec(
            num_scalar_prefetch=0,
            grid=(split, n_inner),
            in_specs=[
                pl.BlockSpec((row_tile, C), lambda c, i: (c * n_inner + i, 0)),
                pl.BlockSpec((row_tile, 1), lambda c, i: (c * n_inner + i, 0)),
            ],
            out_specs=pl.BlockSpec((8, 128), lambda c, i: (c, 0)),
            scratch_shapes=[pltpu.VMEM((row_tile, 1), jnp.float32)],
        ),
        compiler_params=pltpu.CompilerParams(
            dimension_semantics=("parallel", "arbitrary"),
            vmem_limit_bytes=int(vmem_limit),
        ),
        cost_estimate=cost,
    )(logits, targets)

    # One scalar slot per core-split, at sublane stride 8 / lane 0.
    loss_sum = jnp.sum(partial[::8, 0])
    # Mean over valid rows; NaN if every target is -1 (matches torch semantics).
    return (loss_sum / denom).astype(jnp.float32)


def _reference_ppd(logits, targets):
    """Pure-JAX reference for verification."""
    x = logits.astype(jnp.float32)
    t = targets.astype(jnp.int32)
    valid = t != -1
    safe_t = jnp.where(valid, t, 0)
    picked = jnp.take_along_axis(x, safe_t[:, None], axis=-1)[:, 0]
    loss = (1.0 - picked) ** 2
    return jnp.sum(jnp.where(valid, loss, 0.0)) / jnp.sum(valid.astype(jnp.float32))


if __name__ == "__main__":
    key = jax.random.PRNGKey(0)
    k1, k2, k3, k4 = jax.random.split(key, 4)

    # Case 1: f32 logits, N not a multiple of the tile (exercises padding),
    # single-tile grid (split collapses to 1).
    N, C = 100, 32
    contrast_logits = jax.random.normal(k1, (N, C), dtype=jnp.float32)
    contrast_target = jax.random.randint(k2, (N,), 0, C).astype(jnp.float32)
    ignore_mask = jax.random.bernoulli(k3, 0.25, (N,))
    contrast_target = jnp.where(ignore_mask, -1.0, contrast_target)

    out = jax.block_until_ready(ppd_loss(contrast_logits, contrast_target))
    ref = _reference_ppd(contrast_logits, contrast_target)
    assert jnp.allclose(out, ref, rtol=1e-5, atol=1e-5), (out, ref)

    # Case 2: bf16 logits streamed natively, forced small tile -> (2, 3) grid with
    # padding, exercising the 2-way split + cross-tile VMEM accumulation path.
    N2, C2 = 300, 48
    logits2 = jax.random.normal(k4, (N2, C2), dtype=jnp.bfloat16)
    target2 = jax.random.randint(k2, (N2,), 0, C2)
    target2 = jnp.where(jax.random.bernoulli(k3, 0.2, (N2,)), -1, target2)

    out2 = jax.block_until_ready(ppd_loss(logits2, target2, row_tile=64))
    ref2 = _reference_ppd(logits2, target2)
    assert jnp.allclose(out2, ref2, rtol=1e-3, atol=1e-3), (out2, ref2)

    print("KERNEL_OK")
</pallas_src>

<mosaic_0001>
module attributes {stable_mosaic.version = 11 : i64} {
  func.func @_ppd_kernel(%arg0: i32, %arg1: i32, %arg2: memref<128x32xf32, #tpu.memory_space<vmem>>, %arg3: memref<128x1xi32, #tpu.memory_space<vmem>>, %arg4: memref<8x128xf32, #tpu.memory_space<vmem>>, %arg5: memref<128x1xf32, #tpu.memory_space<vmem>>) attributes {dimension_semantics = [#tpu.dimension_semantics<parallel>, #tpu.dimension_semantics<arbitrary>], iteration_bounds = array<i64: 1, 1>, scalar_prefetch = 0 : i64, scratch_operands = 1 : i64, tpu.core_type = #tpu.core_type<tc>, window_params = [{transform_indices = @transform_0, window_bounds = array<i64: 128, 32>}, {transform_indices = @transform_1, window_bounds = array<i64: 128, 1>}, {transform_indices = @transform_2, window_bounds = array<i64: 8, 128>}]} {
    %c0_i32 = arith.constant 0 : i32
    %0 = arith.cmpi eq, %arg1, %c0_i32 : i32
    %1 = arith.extui %0 : i1 to i32
    %c0_i32_0 = arith.constant 0 : i32
    %2 = arith.cmpi ne, %1, %c0_i32_0 : i32
    scf.if %2 {
      %cst_14 = arith.constant 0.000000e+00 : f32
      %25 = vector.broadcast %cst_14 : f32 to vector<128x1xf32>
      %c0_15 = arith.constant 0 : index
      %c0_16 = arith.constant 0 : index
      %26 = vector.load %arg5[%c0_15, %c0_16] : memref<128x1xf32, #tpu.memory_space<vmem>>, vector<128x1xf32>
      tpu.vector_store %arg5[%c0_15, %c0_16], %25 {strides = array<i32>} : memref<128x1xf32, #tpu.memory_space<vmem>>, vector<128x1xf32>,
    } else {
    }
    %c0 = arith.constant 0 : index
    %c0_1 = arith.constant 0 : index
    %3 = vector.load %arg2[%c0, %c0_1] : memref<128x32xf32, #tpu.memory_space<vmem>>, vector<128x32xf32>
    %c0_2 = arith.constant 0 : index
    %c0_3 = arith.constant 0 : index
    %4 = vector.load %arg3[%c0_2, %c0_3] : memref<128x1xi32, #tpu.memory_space<vmem>>, vector<128x1xi32>
    %5 = tpu.iota {dimensions = array<i32: 1>} : vector<128x32xi32>
    %6 = vector.broadcast %4 : vector<128x1xi32> to vector<128x32xi32>
    %7 = arith.cmpi eq, %5, %6 : vector<128x32xi32>
    %cst = arith.constant 0.000000e+00 : f32
    %8 = vector.broadcast %cst : f32 to vector<128x32xf32>
    %9 = arith.select %7, %3, %8 : vector<128x32xi1>, vector<128x32xf32>
    %cst_4 = arith.constant 1.000000e+00 : f32
    %10 = vector.broadcast %cst_4 : f32 to vector<32x1xf32>
    %cst_5 = arith.constant dense<0.000000e+00> : vector<128x1xf32>
    %11 = tpu.matmul %9, %10, %cst_5 {dimension_numbers = #tpu.dot_dimension_numbers<[1], [0], [0], [1], [0, 0, 1, 1], [], []>} : vector<128x32xf32>, vector<32x1xf32>, vector<128x1xf32> -> vector<128x1xf32>
    %cst_6 = arith.constant 1.000000e+00 : f32
    %12 = vector.broadcast %cst_6 : f32 to vector<128x1xf32>
    %13 = arith.subf %12, %11 : vector<128x1xf32>
    %c0_7 = arith.constant 0 : index
    %c0_8 = arith.constant 0 : index
    %14 = vector.load %arg5[%c0_7, %c0_8] : memref<128x1xf32, #tpu.memory_space<vmem>>, vector<128x1xf32>
    %c-1_i32 = arith.constant -1 : i32
    %15 = vector.broadcast %c-1_i32 : i32 to vector<128x1xi32>
    %16 = arith.cmpi ne, %4, %15 : vector<128x1xi32>
    %17 = arith.mulf %13, %13 : vector<128x1xf32>
    %cst_9 = arith.constant 0.000000e+00 : f32
    %18 = vector.broadcast %cst_9 : f32 to vector<128x1xf32>
    %19 = arith.select %16, %17, %18 : vector<128x1xi1>, vector<128x1xf32>
    %20 = arith.addf %14, %19 : vector<128x1xf32>
    %c0_10 = arith.constant 0 : index
    %c0_11 = arith.constant 0 : index
    %21 = vector.load %arg5[%c0_10, %c0_11] : memref<128x1xf32, #tpu.memory_space<vmem>>, vector<128x1xf32>
    tpu.vector_store %arg5[%c0_10, %c0_11], %20 {strides = array<i32>} : memref<128x1xf32, #tpu.memory_space<vmem>>, vector<128x1xf32>,
    %c0_i32_12 = arith.constant 0 : i32
    %22 = arith.cmpi eq, %arg1, %c0_i32_12 : i32
    %23 = arith.extui %22 : i1 to i32
    %c0_i32_13 = arith.constant 0 : i32
    %24 = arith.cmpi ne, %23, %c0_i32_13 : i32
    scf.if %24 {
      %c0_14 = arith.constant 0 : index
      %c0_15 = arith.constant 0 : index
      %25 = vector.load %arg5[%c0_14, %c0_15] : memref<128x1xf32, #tpu.memory_space<vmem>>, vector<128x1xf32>
      %26 = vector.shape_cast %25 : vector<128x1xf32> to vector<1x128x1xf32>
      %cst_16 = arith.constant dense<0.000000e+00> : vector<1xf32>
      %27 = vector.multi_reduction <add>, %26, %cst_16 [1, 2] : vector<1x128x1xf32> to vector<1xf32>
      %28 = vector.shape_cast %27 : vector<1xf32> to vector<1x1x1xf32>
      %29 = vector.extract %28[0, 0, 0] : f32 from vector<1x1x1xf32>
      %30 = vector.broadcast %29 : f32 to vector<8x128xf32>
      %c0_17 = arith.constant 0 : index
      %c0_18 = arith.constant 0 : index
      %31 = vector.load %arg4[%c0_17, %c0_18] : memref<8x128xf32, #tpu.memory_space<vmem>>, vector<8x128xf32>
      tpu.vector_store %arg4[%c0_17, %c0_18], %30 {strides = array<i32>} : memref<8x128xf32, #tpu.memory_space<vmem>>, vector<8x128xf32>,
    } else {
    }
    return
  }
  func.func @transform_0(%arg0: i32, %arg1: i32) -> (i32, i32) {
    %c1_i32 = arith.constant 1 : i32
    %0 = arith.muli %arg0, %c1_i32 : i32
    %1 = arith.addi %0, %arg1 : i32
    %c0_i32 = arith.constant 0 : i32
    %c0_i32_0 = arith.constant 0 : i32
    return %1, %c0_i32 : i32, i32
  }
  func.func @transform_1(%arg0: i32, %arg1: i32) -> (i32, i32) {
    %c1_i32 = arith.constant 1 : i32
    %0 = arith.muli %arg0, %c1_i32 : i32
    %1 = arith.addi %0, %arg1 : i32
    %c0_i32 = arith.constant 0 : i32
    %c0_i32_0 = arith.constant 0 : i32
    return %1, %c0_i32 : i32, i32
  }
  func.func @transform_2(%arg0: i32, %arg1: i32) -> (i32, i32) {
    %c0_i32 = arith.constant 0 : i32
    %c0_i32_0 = arith.constant 0 : i32
    return %arg0, %c0_i32 : i32, i32
  }
}

</mosaic_0001>

<llo_original>
// kernel: tpu_custom_call.1
$region0: #{tpu_custom_call.1}
  #allocation0 [shape = 'u32[]', space=smem, size = 0x4, offset = 0x4, fixed_abs, tag = 'smem constant byte address 0x4 - core index']
  #allocation1 [shape = 'u32[144,128]{1,0:T(1,128)}', space=vmem, size = 0x12000, scoped, tag = 'internal scratch']
  #allocation2 [shape = 'f32[128,1]{1,0:T(8,128)}', space=vmem, size = 0x10000, scoped, tag = 'scratch operand']
  %s0 = inlined_call_operand.vmem [shape: f32[128,32], index: 0, kind: input, shape index: {}]
  %s1 = inlined_call_operand.vmem [shape: s32[128,1], index: 1, kind: input, shape index: {}]
  %s2 = inlined_call_operand.hbm [shape: f32[8,128], index: 2, kind: output, shape index: {}]
  %s3 = sld [smem:[#allocation0]]
  $region26: #{tpu_custom_call.1} parent=0
    _
  %s5 = ssub.s32 1, %s3
  %s6 = scalar_select 0, %s5, %s3
  $region1: #{tpu_custom_call.1} parent=0
    #allocation3 [shape = 'u8[4096]{0}', space=vmem, size = 0x1000, scoped, tag = 'output window, operand 0, single buffered']
    #allocation4 [shape = 's32[1]{0}', space=sflag, size = 0x4, scoped, tag = 'scoped memory for tpu_custom_call.1']
    %7 = vsyncpa [#allocation4], 0
    // Predicated region
    $region2: #{tpu_custom_call.1} parent=1 // pred_check
      _
    $region3: #{tpu_custom_call.1} parent=1 // pred_check_branch
      %9 = sbr.rel (0) target = $region5
    $region4: #{tpu_custom_call.1} parent=1 // pred_region
      %s10 = sadd.s32 0, 0
      %s11 = smul.u32 16, %s10
      %p12 = scmp.lt.s32.totalorder %s11, 15
      %s13 = scalar_select %p12, %s11, 15
      %s14 = smul.addr %s13, 8
      %s15 = scalar_lea.vmem %s0, %s14
      %s16 = sadd.s32 0, 0
      %s17 = smul.u32 16, %s16
    $region5: #{tpu_custom_call.1} parent=1 // pred_fallthru
      _
    // Predicated region
    $region6: #{tpu_custom_call.1} parent=1 // pred_check
      _
    $region7: #{tpu_custom_call.1} parent=1 // pred_check_branch
      %19 = sbr.rel (0) target = $region9
    $region8: #{tpu_custom_call.1} parent=1 // pred_region
      %s20 = sadd.s32 0, 0
      %s21 = smul.u32 16, %s20
      %p22 = scmp.lt.s32.totalorder %s21, 15
      %s23 = scalar_select %p22, %s21, 15
      %s24 = smul.addr %s23, 8
      %s25 = scalar_lea.vmem %s1, %s24
      %s26 = sadd.s32 0, 0
      %s27 = smul.u32 16, %s26
    $region9: #{tpu_custom_call.1} parent=1 // pred_fallthru
      _
    %s28 = sadd.s32 0, 0
    %s29 = smul.u32 16, %s28
    %p30 = scmp.lt.s32.totalorder %s29, 15
    %s31 = scalar_select %p30, %s29, 15
    %s32 = smul.addr %s31, 8
    %s33 = scalar_lea.vmem %s0, %s32
    %s34 = sadd.s32 0, 0
    %s35 = smul.u32 16, %s34
    %p36 = scmp.lt.s32.totalorder %s35, 15
    %s37 = scalar_select %p36, %s35, 15
    %s38 = smul.addr %s37, 8
    %s39 = scalar_lea.vmem %s1, %s38
    %s40 = sadd.s32 0, 0
    %s41 = smul.u32 16, %s40
    %p42 = scmp.lt.s32.totalorder %s41, 15
    %s43 = scalar_select %p42, %s41, 15
    %s44 = smul.addr %s43, 8
    %s45 = scalar_lea.vmem %s0, %s44
    %s46 = sadd.s32 0, 0
    %s47 = smul.u32 16, %s46
    %s48 = sadd.s32 0, 0
    %s49 = smul.u32 16, %s48
    %p50 = scmp.lt.s32.totalorder %s49, 15
    %s51 = scalar_select %p50, %s49, 15
    %s52 = smul.addr %s51, 8
    %s53 = scalar_lea.vmem %s1, %s52
    %s54 = sadd.s32 0, 0
    %s55 = smul.u32 16, %s54
    %p56 = scmp.eq.s32.totalorder 0, 0
    // Predicated region
    $region10: #{tpu_custom_call.1} parent=1 // pred_check
      %p57 = pneg %p56
    $region11: #{tpu_custom_call.1} parent=1 // pred_check_branch
      %59 = sbr.rel (%p57) target = $region13
    $region12: #{tpu_custom_call.1} parent=1 // pred_region
      %vm60 = vcmask 7168
      %61 = vst.msk [vmem:[#allocation2] sm:$0xff] %vm60, 0.0
      %62 = vst.msk [vmem:[#allocation2 + $0x8] sm:$0xff] %vm60, 0.0
      %63 = vst.msk [vmem:[#allocation2 + $0x10] sm:$0xff] %vm60, 0.0
      %64 = vst.msk [vmem:[#allocation2 + $0x18] sm:$0xff] %vm60, 0.0
      %65 = vst.msk [vmem:[#allocation2 + $0x20] sm:$0xff] %vm60, 0.0
      %66 = vst.msk [vmem:[#allocation2 + $0x28] sm:$0xff] %vm60, 0.0
      %67 = vst.msk [vmem:[#allocation2 + $0x30] sm:$0xff] %vm60, 0.0
      %68 = vst.msk [vmem:[#allocation2 + $0x38] sm:$0xff] %vm60, 0.0
      %69 = vst.msk [vmem:[#allocation2 + $0x40] sm:$0xff] %vm60, 0.0
      %70 = vst.msk [vmem:[#allocation2 + $0x48] sm:$0xff] %vm60, 0.0
      %71 = vst.msk [vmem:[#allocation2 + $0x50] sm:$0xff] %vm60, 0.0
      %72 = vst.msk [vmem:[#allocation2 + $0x58] sm:$0xff] %vm60, 0.0
      %73 = vst.msk [vmem:[#allocation2 + $0x60] sm:$0xff] %vm60, 0.0
      %74 = vst.msk [vmem:[#allocation2 + $0x68] sm:$0xff] %vm60, 0.0
      %75 = vst.msk [vmem:[#allocation2 + $0x70] sm:$0xff] %vm60, 0.0
      %76 = vst.msk [vmem:[#allocation2 + $0x78] sm:$0xff] %vm60, 0.0
    $region13: #{tpu_custom_call.1} parent=1 // pred_fallthru
      _
    %v77 = vld [vmem:[%s45] sm:$0xff]
    %v78 = vld [vmem:[%s45 + $0x8] sm:$0xff]
    %v79 = vld [vmem:[%s45 + $0x10] sm:$0xff]
    %v80 = vld [vmem:[%s45 + $0x18] sm:$0xff]
    %v81 = vld [vmem:[%s45 + $0x20] sm:$0xff]
    %v82 = vld [vmem:[%s45 + $0x28] sm:$0xff]
    %v83 = vld [vmem:[%s45 + $0x30] sm:$0xff]
    %v84 = vld [vmem:[%s45 + $0x38] sm:$0xff]
    %v85 = vld [vmem:[%s45 + $0x40] sm:$0xff]
    %v86 = vld [vmem:[%s45 + $0x48] sm:$0xff]
    %v87 = vld [vmem:[%s45 + $0x50] sm:$0xff]
    %v88 = vld [vmem:[%s45 + $0x58] sm:$0xff]
    %v89 = vld [vmem:[%s45 + $0x60] sm:$0xff]
    %v90 = vld [vmem:[%s45 + $0x68] sm:$0xff]
    %v91 = vld [vmem:[%s45 + $0x70] sm:$0xff]
    %v92 = vld [vmem:[%s45 + $0x78] sm:$0xff]
    %v93 = vld [vmem:[%s53] sm:$0xff]
    %v94 = vld [vmem:[%s53 + $0x8] sm:$0xff]
    %v95 = vld [vmem:[%s53 + $0x10] sm:$0xff]
    %v96 = vld [vmem:[%s53 + $0x18] sm:$0xff]
    %v97 = vld [vmem:[%s53 + $0x20] sm:$0xff]
    %v98 = vld [vmem:[%s53 + $0x28] sm:$0xff]
    %v99 = vld [vmem:[%s53 + $0x30] sm:$0xff]
    %v100 = vld [vmem:[%s53 + $0x38] sm:$0xff]
    %v101 = vld [vmem:[%s53 + $0x40] sm:$0xff]
    %v102 = vld [vmem:[%s53 + $0x48] sm:$0xff]
    %v103 = vld [vmem:[%s53 + $0x50] sm:$0xff]
    %v104 = vld [vmem:[%s53 + $0x58] sm:$0xff]
    %v105 = vld [vmem:[%s53 + $0x60] sm:$0xff]
    %v106 = vld [vmem:[%s53 + $0x68] sm:$0xff]
    %v107 = vld [vmem:[%s53 + $0x70] sm:$0xff]
    %v108 = vld [vmem:[%s53 + $0x78] sm:$0xff]
    %v109 = vlaneseq
    %v110 = vand.u32 %v109, 127
    %111 = vset.pattern.permute.xlu0 0
    %112 = vperm.xlu0 %111, %v93
    %v113 = vpop.permute.xlu0 %112
    %114 = vset.pattern.permute.xlu0 0
    %115 = vperm.xlu0 %114, %v94
    %v116 = vpop.permute.xlu0 %115
    %117 = vset.pattern.permute.xlu0 0
    %118 = vperm.xlu0 %117, %v95
    %v119 = vpop.permute.xlu0 %118
    %120 = vset.pattern.permute.xlu0 0
    %121 = vperm.xlu0 %120, %v96
    %v122 = vpop.permute.xlu0 %121
    %123 = vset.pattern.permute.xlu0 0
    %124 = vperm.xlu0 %123, %v97
    %v125 = vpop.permute.xlu0 %124
    %126 = vset.pattern.permute.xlu0 0
    %127 = vperm.xlu0 %126, %v98
    %v128 = vpop.permute.xlu0 %127
    %129 = vset.pattern.permute.xlu0 0
    %130 = vperm.xlu0 %129, %v99
    %v131 = vpop.permute.xlu0 %130
    %132 = vset.pattern.permute.xlu0 0
    %133 = vperm.xlu0 %132, %v100
    %v134 = vpop.permute.xlu0 %133
    %135 = vset.pattern.permute.xlu0 0
    %136 = vperm.xlu0 %135, %v101
    %v137 = vpop.permute.xlu0 %136
    %138 = vset.pattern.permute.xlu0 0
    %139 = vperm.xlu0 %138, %v102
    %v140 = vpop.permute.xlu0 %139
    %141 = vset.pattern.permute.xlu0 0
    %142 = vperm.xlu0 %141, %v103
    %v143 = vpop.permute.xlu0 %142
    %144 = vset.pattern.permute.xlu0 0
    %145 = vperm.xlu0 %144, %v104
    %v146 = vpop.permute.xlu0 %145
    %147 = vset.pattern.permute.xlu0 0
    %148 = vperm.xlu0 %147, %v105
    %v149 = vpop.permute.xlu0 %148
    %150 = vset.pattern.permute.xlu0 0
    %151 = vperm.xlu0 %150, %v106
    %v152 = vpop.permute.xlu0 %151
    %153 = vset.pattern.permute.xlu0 0
    %154 = vperm.xlu0 %153, %v107
    %v155 = vpop.permute.xlu0 %154
    %156 = vset.pattern.permute.xlu0 0
    %157 = vperm.xlu0 %156, %v108
    %v158 = vpop.permute.xlu0 %157
    %vm159 = vcmp.eq.s32.totalorder %v110, %v113
    %vm160 = vcmp.eq.s32.totalorder %v110, %v116
    %vm161 = vcmp.eq.s32.totalorder %v110, %v119
    %vm162 = vcmp.eq.s32.totalorder %v110, %v122
    %vm163 = vcmp.eq.s32.totalorder %v110, %v125
    %vm164 = vcmp.eq.s32.totalorder %v110, %v128
    %vm165 = vcmp.eq.s32.totalorder %v110, %v131
    %vm166 = vcmp.eq.s32.totalorder %v110, %v134
    %vm167 = vcmp.eq.s32.totalorder %v110, %v137
    %vm168 = vcmp.eq.s32.totalorder %v110, %v140
    %vm169 = vcmp.eq.s32.totalorder %v110, %v143
    %vm170 = vcmp.eq.s32.totalorder %v110, %v146
    %vm171 = vcmp.eq.s32.totalorder %v110, %v149
    %vm172 = vcmp.eq.s32.totalorder %v110, %v152
    %vm173 = vcmp.eq.s32.totalorder %v110, %v155
    %vm174 = vcmp.eq.s32.totalorder %v110, %v158
    %v175 = vsel %vm159, %v77, 0.0
    %v176 = vsel %vm160, %v78, 0.0
    %v177 = vsel %vm161, %v79, 0.0
    %v178 = vsel %vm162, %v80, 0.0
    %v179 = vsel %vm163, %v81, 0.0
    %v180 = vsel %vm164, %v82, 0.0
    %v181 = vsel %vm165, %v83, 0.0
    %v182 = vsel %vm166, %v84, 0.0
    %v183 = vsel %vm167, %v85, 0.0
    %v184 = vsel %vm168, %v86, 0.0
    %v185 = vsel %vm169, %v87, 0.0
    %v186 = vsel %vm170, %v88, 0.0
    %v187 = vsel %vm171, %v89, 0.0
    %v188 = vsel %vm172, %v90, 0.0
    %v189 = vsel %vm173, %v91, 0.0
    %v190 = vsel %vm174, %v92, 0.0
    %vm191 = vcmask 261120
    %v193 = vsel %vm191, %v175, 0
    %v196 = vsel %vm191, %v176, 0
    %v199 = vsel %vm191, %v177, 0
    %v202 = vsel %vm191, %v178, 0
    %v205 = vsel %vm191, %v179, 0
    %v208 = vsel %vm191, %v180, 0
    %v211 = vsel %vm191, %v181, 0
    %v214 = vsel %vm191, %v182, 0
    %v217 = vsel %vm191, %v183, 0
    %v220 = vsel %vm191, %v184, 0
    %v223 = vsel %vm191, %v185, 0
    %v226 = vsel %vm191, %v186, 0
    %v229 = vsel %vm191, %v187, 0
    %v232 = vsel %vm191, %v188, 0
    %v235 = vsel %vm191, %v189, 0
    %v238 = vsel %vm191, %v190, 0
    %240 = vmatprep.subr.mxu0 0.0
    %241 = vmatpush1.msra.mxu0 1.0
    %242 = vmatprep.subr.mxu0 0.0
    %243 = vmatpush1.msra.mxu0 1.0
    %244 = vmatprep.subr.mxu0 0.0
    %245 = vmatpush1.msra.mxu0 1.0
    %246 = vmatprep.subr.mxu0 0.0
    %247 = vmatpush1.msra.mxu0 1.0
    %248 = vmatprep.subr.mxu0 0.0
    %249 = vmatpush1.msra.mxu0 0.0
    %250 = vmatprep.subr.mxu0 0.0
    %251 = vmatpush1.msra.mxu0 0.0
    %252 = vmatprep.subr.mxu0 0.0
    %253 = vmatpush1.msra.mxu0 0.0
    %254 = vmatprep.subr.mxu0 0.0
    %255 = vmatpush1.msra.mxu0 0.0
    %256 = vmatprep.subr.mxu0 0.0
    %257 = vmatpush1.msra.mxu0 0.0
    %258 = vmatprep.subr.mxu0 0.0
    %259 = vmatpush1.msra.mxu0 0.0
    %260 = vmatprep.subr.mxu0 0.0
    %261 = vmatpush1.msra.mxu0 0.0
    %262 = vmatprep.subr.mxu0 0.0
    %263 = vmatpush1.msra.mxu0 0.0
    %264 = vmatprep.subr.mxu0 0.0
    %265 = vmatpush1.msra.mxu0 0.0
    %266 = vmatprep.subr.mxu0 0.0
    %267 = vmatpush1.msra.mxu0 0.0
    %268 = vmatprep.subr.mxu0 0.0
    %269 = vmatpush1.msra.mxu0 0.0
    %270 = vmatprep.subr.mxu0 0.0
    %271 = vmatpush1.msra.mxu0 0.0
    %272 = vmatprep.subr.mxu0 0.0
    %273 = vmatpush1.msra.mxu0 0.0
    %274 = vmatprep.subr.mxu0 0.0
    %275 = vmatpush1.msra.mxu0 0.0
    %276 = vmatprep.subr.mxu0 0.0
    %277 = vmatpush1.msra.mxu0 0.0
    %278 = vmatprep.subr.mxu0 0.0
    %279 = vmatpush1.msra.mxu0 0.0
    %280 = vmatprep.subr.mxu0 0.0
    %281 = vmatpush1.msra.mxu0 0.0
    %282 = vmatprep.subr.mxu0 0.0
    %283 = vmatpush1.msra.mxu0 0.0
    %284 = vmatprep.subr.mxu0 0.0
    %285 = vmatpush1.msra.mxu0 0.0
    %286 = vmatprep.subr.mxu0 0.0
    %287 = vmatpush1.msra.mxu0 0.0
    %288 = vmatprep.subr.mxu0 0.0
    %289 = vmatpush1.msra.mxu0 0.0
    %290 = vmatprep.subr.mxu0 0.0
    %291 = vmatpush1.msra.mxu0 0.0
    %292 = vmatprep.subr.mxu0 0.0
    %293 = vmatpush1.msra.mxu0 0.0
    %294 = vmatprep.subr.mxu0 0.0
    %295 = vmatpush1.msra.mxu0 0.0
    %296 = vmatprep.subr.mxu0 0.0
    %297 = vmatpush1.msra.mxu0 0.0
    %298 = vmatprep.subr.mxu0 0.0
    %299 = vmatpush1.msra.mxu0 0.0
    %300 = vmatprep.subr.mxu0 0.0
    %301 = vmatpush1.msra.mxu0 0.0
    %302 = vmatprep.subr.mxu0 0.0
    %303 = vmatpush1.msra.mxu0 0.0
    %304 = vmatprep.mubr.f32.mxu0 0.0
    %305 = vmatmul.mubr.f32.gmra.mrb[0].mxu0 %v193
    %v306 = vpop.f32.mrb[0].mxu0
    %v307 = vadd.f32 0.0, %v306
    %v308 = vpop.f32.mrb[0].mxu0
    %309 = vmatprep.mubr.f32.mxu0 0.0
    %310 = vmatmul.mubr.f32.gmra.mrb[0].mxu0 %v196
    %v311 = vpop.f32.mrb[0].mxu0
    %v312 = vadd.f32 0.0, %v311
    %v313 = vpop.f32.mrb[0].mxu0
    %314 = vmatprep.mubr.f32.mxu0 0.0
    %315 = vmatmul.mubr.f32.gmra.mrb[0].mxu0 %v199
    %v316 = vpop.f32.mrb[0].mxu0
    %v317 = vadd.f32 0.0, %v316
    %v318 = vpop.f32.mrb[0].mxu0
    %319 = vmatprep.mubr.f32.mxu0 0.0
    %320 = vmatmul.mubr.f32.gmra.mrb[0].mxu0 %v202
    %v321 = vpop.f32.mrb[0].mxu0
    %v322 = vadd.f32 0.0, %v321
    %v323 = vpop.f32.mrb[0].mxu0
    %324 = vmatprep.mubr.f32.mxu0 0.0
    %325 = vmatmul.mubr.f32.gmra.mrb[0].mxu0 %v205
    %v326 = vpop.f32.mrb[0].mxu0
    %v327 = vadd.f32 0.0, %v326
    %v328 = vpop.f32.mrb[0].mxu0
    %329 = vmatprep.mubr.f32.mxu0 0.0
    %330 = vmatmul.mubr.f32.gmra.mrb[0].mxu0 %v208
    %v331 = vpop.f32.mrb[0].mxu0
    %v332 = vadd.f32 0.0, %v331
    %v333 = vpop.f32.mrb[0].mxu0
    %334 = vmatprep.mubr.f32.mxu0 0.0
    %335 = vmatmul.mubr.f32.gmra.mrb[0].mxu0 %v211
    %v336 = vpop.f32.mrb[0].mxu0
    %v337 = vadd.f32 0.0, %v336
    %v338 = vpop.f32.mrb[0].mxu0
    %339 = vmatprep.mubr.f32.mxu0 0.0
    %340 = vmatmul.mubr.f32.gmra.mrb[0].mxu0 %v214
    %v341 = vpop.f32.mrb[0].mxu0
    %v342 = vadd.f32 0.0, %v341
    %v343 = vpop.f32.mrb[0].mxu0
    %344 = vmatprep.mubr.f32.mxu0 0.0
    %345 = vmatmul.mubr.f32.gmra.mrb[0].mxu0 %v217
    %v346 = vpop.f32.mrb[0].mxu0
    %v347 = vadd.f32 0.0, %v346
    %v348 = vpop.f32.mrb[0].mxu0
    %349 = vmatprep.mubr.f32.mxu0 0.0
    %350 = vmatmul.mubr.f32.gmra.mrb[0].mxu0 %v220
    %v351 = vpop.f32.mrb[0].mxu0
    %v352 = vadd.f32 0.0, %v351
    %v353 = vpop.f32.mrb[0].mxu0
    %354 = vmatprep.mubr.f32.mxu0 0.0
    %355 = vmatmul.mubr.f32.gmra.mrb[0].mxu0 %v223
    %v356 = vpop.f32.mrb[0].mxu0
    %v357 = vadd.f32 0.0, %v356
    %v358 = vpop.f32.mrb[0].mxu0
    %359 = vmatprep.mubr.f32.mxu0 0.0
    %360 = vmatmul.mubr.f32.gmra.mrb[0].mxu0 %v226
    %v361 = vpop.f32.mrb[0].mxu0
    %v362 = vadd.f32 0.0, %v361
    %v363 = vpop.f32.mrb[0].mxu0
    %364 = vmatprep.mubr.f32.mxu0 0.0
    %365 = vmatmul.mubr.f32.gmra.mrb[0].mxu0 %v229
    %v366 = vpop.f32.mrb[0].mxu0
    %v367 = vadd.f32 0.0, %v366
    %v368 = vpop.f32.mrb[0].mxu0
    %369 = vmatprep.mubr.f32.mxu0 0.0
    %370 = vmatmul.mubr.f32.gmra.mrb[0].mxu0 %v232
    %v371 = vpop.f32.mrb[0].mxu0
    %v372 = vadd.f32 0.0, %v371
    %v373 = vpop.f32.mrb[0].mxu0
    %374 = vmatprep.mubr.f32.mxu0 0.0
    %375 = vmatmul.mubr.f32.gmra.mrb[0].mxu0 %v235
    %v376 = vpop.f32.mrb[0].mxu0
    %v377 = vadd.f32 0.0, %v376
    %v378 = vpop.f32.mrb[0].mxu0
    %379 = vmatprep.mubr.f32.mxu0 0.0
    %380 = vmatmul.mubr.f32.gmra.mrb[0].mxu0 %v238
    %v381 = vpop.f32.mrb[0].mxu0
    %v382 = vadd.f32 0.0, %v381
    %v383 = vpop.f32.mrb[0].mxu0
    %384 = vdwg.mxu0
    %v385 = vsub.f32 1.0, %v307
    %v386 = vsub.f32 1.0, %v312
    %v387 = vsub.f32 1.0, %v317
    %v388 = vsub.f32 1.0, %v322
    %v389 = vsub.f32 1.0, %v327
    %v390 = vsub.f32 1.0, %v332
    %v391 = vsub.f32 1.0, %v337
    %v392 = vsub.f32 1.0, %v342
    %v393 = vsub.f32 1.0, %v347
    %v394 = vsub.f32 1.0, %v352
    %v395 = vsub.f32 1.0, %v357
    %v396 = vsub.f32 1.0, %v362
    %v397 = vsub.f32 1.0, %v367
    %v398 = vsub.f32 1.0, %v372
    %v399 = vsub.f32 1.0, %v377
    %v400 = vsub.f32 1.0, %v382
    %v401 = vld [vmem:[#allocation2] sm:$0xff]
    %v402 = vld [vmem:[#allocation2 + $0x8] sm:$0xff]
    %v403 = vld [vmem:[#allocation2 + $0x10] sm:$0xff]
    %v404 = vld [vmem:[#allocation2 + $0x18] sm:$0xff]
    %v405 = vld [vmem:[#allocation2 + $0x20] sm:$0xff]
    %v406 = vld [vmem:[#allocation2 + $0x28] sm:$0xff]
    %v407 = vld [vmem:[#allocation2 + $0x30] sm:$0xff]
    %v408 = vld [vmem:[#allocation2 + $0x38] sm:$0xff]
    %v409 = vld [vmem:[#allocation2 + $0x40] sm:$0xff]
    %v410 = vld [vmem:[#allocation2 + $0x48] sm:$0xff]
    %v411 = vld [vmem:[#allocation2 + $0x50] sm:$0xff]
    %v412 = vld [vmem:[#allocation2 + $0x58] sm:$0xff]
    %v413 = vld [vmem:[#allocation2 + $0x60] sm:$0xff]
    %v414 = vld [vmem:[#allocation2 + $0x68] sm:$0xff]
    %v415 = vld [vmem:[#allocation2 + $0x70] sm:$0xff]
    %v416 = vld [vmem:[#allocation2 + $0x78] sm:$0xff]
    %vm417 = vcmp.ne.s32.totalorder %v93, 4294967295
    %vm418 = vcmp.ne.s32.totalorder %v94, 4294967295
    %vm419 = vcmp.ne.s32.totalorder %v95, 4294967295
    %vm420 = vcmp.ne.s32.totalorder %v96, 4294967295
    %vm421 = vcmp.ne.s32.totalorder %v97, 4294967295
    %vm422 = vcmp.ne.s32.totalorder %v98, 4294967295
    %vm423 = vcmp.ne.s32.totalorder %v99, 4294967295
    %vm424 = vcmp.ne.s32.totalorder %v100, 4294967295
    %vm425 = vcmp.ne.s32.totalorder %v101, 4294967295
    %vm426 = vcmp.ne.s32.totalorder %v102, 4294967295
    %vm427 = vcmp.ne.s32.totalorder %v103, 4294967295
    %vm428 = vcmp.ne.s32.totalorder %v104, 4294967295
    %vm429 = vcmp.ne.s32.totalorder %v105, 4294967295
    %vm430 = vcmp.ne.s32.totalorder %v106, 4294967295
    %vm431 = vcmp.ne.s32.totalorder %v107, 4294967295
    %vm432 = vcmp.ne.s32.totalorder %v108, 4294967295
    %v433 = vmul.f32 %v385, %v385
    %v434 = vmul.f32 %v386, %v386
    %v435 = vmul.f32 %v387, %v387
    %v436 = vmul.f32 %v388, %v388
    %v437 = vmul.f32 %v389, %v389
    %v438 = vmul.f32 %v390, %v390
    %v439 = vmul.f32 %v391, %v391
    %v440 = vmul.f32 %v392, %v392
    %v441 = vmul.f32 %v393, %v393
    %v442 = vmul.f32 %v394, %v394
    %v443 = vmul.f32 %v395, %v395
    %v444 = vmul.f32 %v396, %v396
    %v445 = vmul.f32 %v397, %v397
    %v446 = vmul.f32 %v398, %v398
    %v447 = vmul.f32 %v399, %v399
    %v448 = vmul.f32 %v400, %v400
    %v449 = vsel %vm417, %v433, 0.0
    %v450 = vsel %vm418, %v434, 0.0
    %v451 = vsel %vm419, %v435, 0.0
    %v452 = vsel %vm420, %v436, 0.0
    %v453 = vsel %vm421, %v437, 0.0
    %v454 = vsel %vm422, %v438, 0.0
    %v455 = vsel %vm423, %v439, 0.0
    %v456 = vsel %vm424, %v440, 0.0
    %v457 = vsel %vm425, %v441, 0.0
    %v458 = vsel %vm426, %v442, 0.0
    %v459 = vsel %vm427, %v443, 0.0
    %v460 = vsel %vm428, %v444, 0.0
    %v461 = vsel %vm429, %v445, 0.0
    %v462 = vsel %vm430, %v446, 0.0
    %v463 = vsel %vm431, %v447, 0.0
    %v464 = vsel %vm432, %v448, 0.0
    %v465 = vadd.f32 %v401, %v449
    %v466 = vadd.f32 %v402, %v450
    %v467 = vadd.f32 %v403, %v451
    %v468 = vadd.f32 %v404, %v452
    %v469 = vadd.f32 %v405, %v453
    %v470 = vadd.f32 %v406, %v454
    %v471 = vadd.f32 %v407, %v455
    %v472 = vadd.f32 %v408, %v456
    %v473 = vadd.f32 %v409, %v457
    %v474 = vadd.f32 %v410, %v458
    %v475 = vadd.f32 %v411, %v459
    %v476 = vadd.f32 %v412, %v460
    %v477 = vadd.f32 %v413, %v461
    %v478 = vadd.f32 %v414, %v462
    %v479 = vadd.f32 %v415, %v463
    %v480 = vadd.f32 %v416, %v464
    %vm481 = vcmask 7168
    %482 = vst.msk [vmem:[#allocation2] sm:$0xff] %vm481, %v465
    %483 = vst.msk [vmem:[#allocation2 + $0x8] sm:$0xff] %vm481, %v466
    %484 = vst.msk [vmem:[#allocation2 + $0x10] sm:$0xff] %vm481, %v467
    %485 = vst.msk [vmem:[#allocation2 + $0x18] sm:$0xff] %vm481, %v468
    %486 = vst.msk [vmem:[#allocation2 + $0x20] sm:$0xff] %vm481, %v469
    %487 = vst.msk [vmem:[#allocation2 + $0x28] sm:$0xff] %vm481, %v470
    %488 = vst.msk [vmem:[#allocation2 + $0x30] sm:$0xff] %vm481, %v471
    %489 = vst.msk [vmem:[#allocation2 + $0x38] sm:$0xff] %vm481, %v472
    %490 = vst.msk [vmem:[#allocation2 + $0x40] sm:$0xff] %vm481, %v473
    %491 = vst.msk [vmem:[#allocation2 + $0x48] sm:$0xff] %vm481, %v474
    %492 = vst.msk [vmem:[#allocation2 + $0x50] sm:$0xff] %vm481, %v475
    %493 = vst.msk [vmem:[#allocation2 + $0x58] sm:$0xff] %vm481, %v476
    %494 = vst.msk [vmem:[#allocation2 + $0x60] sm:$0xff] %vm481, %v477
    %495 = vst.msk [vmem:[#allocation2 + $0x68] sm:$0xff] %vm481, %v478
    %496 = vst.msk [vmem:[#allocation2 + $0x70] sm:$0xff] %vm481, %v479
    %497 = vst.msk [vmem:[#allocation2 + $0x78] sm:$0xff] %vm481, %v480
    // Predicated region
    $region14: #{tpu_custom_call.1} parent=1 // pred_check
      %p498 = pneg %p56
    $region15: #{tpu_custom_call.1} parent=1 // pred_check_branch
      %500 = sbr.rel (%p498) target = $region17
    $region16: #{tpu_custom_call.1} parent=1 // pred_region
      %v501 = vld [vmem:[#allocation2] sm:$0xff]
      %v502 = vld [vmem:[#allocation2 + $0x8] sm:$0xff]
      %v503 = vld [vmem:[#allocation2 + $0x10] sm:$0xff]
      %v504 = vld [vmem:[#allocation2 + $0x18] sm:$0xff]
      %v505 = vld [vmem:[#allocation2 + $0x20] sm:$0xff]
      %v506 = vld [vmem:[#allocation2 + $0x28] sm:$0xff]
      %v507 = vld [vmem:[#allocation2 + $0x30] sm:$0xff]
      %v508 = vld [vmem:[#allocation2 + $0x38] sm:$0xff]
      %v509 = vld [vmem:[#allocation2 + $0x40] sm:$0xff]
      %v510 = vld [vmem:[#allocation2 + $0x48] sm:$0xff]
      %v511 = vld [vmem:[#allocation2 + $0x50] sm:$0xff]
      %v512 = vld [vmem:[#allocation2 + $0x58] sm:$0xff]
      %v513 = vld [vmem:[#allocation2 + $0x60] sm:$0xff]
      %v514 = vld [vmem:[#allocation2 + $0x68] sm:$0xff]
      %v515 = vld [vmem:[#allocation2 + $0x70] sm:$0xff]
      %v516 = vld [vmem:[#allocation2 + $0x78] sm:$0xff]
      %v517 = vsel %vm481, %v501, 0.0
      %v518 = vsel %vm481, %v502, 0.0
      %v519 = vadd.f32 %v517, %v518
      %v520 = vsel %vm481, %v503, 0.0
      %v521 = vadd.f32 %v519, %v520
      %v522 = vsel %vm481, %v504, 0.0
      %v523 = vadd.f32 %v521, %v522
      %v524 = vsel %vm481, %v505, 0.0
      %v525 = vadd.f32 %v523, %v524
      %v526 = vsel %vm481, %v506, 0.0
      %v527 = vadd.f32 %v525, %v526
      %v528 = vsel %vm481, %v507, 0.0
      %v529 = vadd.f32 %v527, %v528
      %v530 = vsel %vm481, %v508, 0.0
      %v531 = vadd.f32 %v529, %v530
      %v532 = vsel %vm481, %v509, 0.0
      %v533 = vadd.f32 %v531, %v532
      %v534 = vsel %vm481, %v510, 0.0
      %v535 = vadd.f32 %v533, %v534
      %v536 = vsel %vm481, %v511, 0.0
      %v537 = vadd.f32 %v535, %v536
      %v538 = vsel %vm481, %v512, 0.0
      %v539 = vadd.f32 %v537, %v538
      %v540 = vsel %vm481, %v513, 0.0
      %v541 = vadd.f32 %v539, %v540
      %v542 = vsel %vm481, %v514, 0.0
      %v543 = vadd.f32 %v541, %v542
      %v544 = vsel %vm481, %v515, 0.0
      %v545 = vadd.f32 %v543, %v544
      %v546 = vsel %vm481, %v516, 0.0
      %v547 = vadd.f32 %v545, %v546
      %548 = vadd.xlane.f32.xlu0 %v547
      %v549 = vpop.xlane.xlu0 %548
      %v550 = vrot.slane %v549, 4
      %v551 = vadd.f32 %v549, %v550
      %v552 = vrot.slane %v551, 2
      %v553 = vadd.f32 %v551, %v552
      %v554 = vrot.slane %v553, 1
      %v555 = vadd.f32 %v553, %v554
      %s556 = vtos %v555
      %v557 = vstv %s556
      %558 = vst [vmem:[#allocation3] sm:$0xff] %v557
    $region17: #{tpu_custom_call.1} parent=1 // pred_fallthru
      _
    // Predicated region
    $region18: #{tpu_custom_call.1} parent=1 // pred_check
      _
    $region19: #{tpu_custom_call.1} parent=1 // pred_check_branch
      %560 = sbr.rel (0) target = $region21
    $region20: #{tpu_custom_call.1} parent=1 // pred_region
      %s562 = ssub.s32 128, 128
      %563 = vsyncadd [#allocation4], %s562
      %s565 = sshll.u32 [#allocation3], 4
      %s566 = int_to_ptr.vmem [resolvable:$true] %s565
      %568 = dma.vmem_to_hbm [thread:$0]  %s566, 128, %s2, [#allocation4]
    $region21: #{tpu_custom_call.1} parent=1 // pred_fallthru
      _
    // Predicated region
    $region22: #{tpu_custom_call.1} parent=1 // pred_check
      _
    $region23: #{tpu_custom_call.1} parent=1 // pred_check_branch
      %570 = sbr.rel (0) target = $region25
    $region24: #{tpu_custom_call.1} parent=1 // pred_region
      %571 = dma.done [#allocation4], 128
    $region25: #{tpu_custom_call.1} parent=1 // pred_fallthru
      _
    %572 = vsyncpa [#allocation4], 1

</llo_original>
